<compile_context>
chip_gen: v7x
topology: tpu7x:2x2x1
jax: 0.10.0
libtpu: 0.0.40
codegen_flags: <defaults>
</compile_context>

<pallas_src>
import functools

import jax
import jax.numpy as jnp
import numpy as np
from jax.experimental import pallas as pl
from jax.experimental.pallas import tpu as pltpu


# ----------------------------------------------------------------------------
# Fused kernel: encoder (Linear+ReLU+BN) -> mean over patches -> head (BN+Linear)
# ----------------------------------------------------------------------------
def mean_mil_kernel(x_ref, w_enc_ref, b_enc_ref, enc_scale_ref, enc_shift_ref,
                    head_scale_ref, head_shift_ref, w_head_ref, b_head_ref,
                    o_ref, acc_ref, *, n_patches, tn):
    j = pl.program_id(1)

    @pl.when(j == 0)
    def _():
        acc_ref[...] = jnp.zeros_like(acc_ref)

    tb = x_ref.shape[0]
    feat = x_ref.shape[2]

    # (tb, tn, F) -> (tb*tn, F): one dense MXU push for all bags in the block.
    x = x_ref[...].reshape(tb * tn, feat)
    y = jnp.dot(x, w_enc_ref[...], preferred_element_type=jnp.float32)
    y = jnp.maximum(y + b_enc_ref[...], 0.0)
    y = y * enc_scale_ref[...] + enc_shift_ref[...]        # encoder BN (eval, folded)

    # Mask block rows that fall past the real patch count (only emitted when
    # tn does not divide n_patches).
    if n_patches % tn != 0:
        row = jax.lax.broadcasted_iota(jnp.int32, (tb * tn, 1), 0) % tn
        valid = (j * tn + row) < n_patches
        y = jnp.where(valid, y, 0.0)

    # Per-bag partial sum of embeddings.
    acc_ref[...] += y.reshape(tb, tn, -1).sum(axis=1)

    @pl.when(j == pl.num_programs(1) - 1)
    def _():
        pooled = acc_ref[...] * (1.0 / n_patches)                       # mean over patches
        pooled = pooled * head_scale_ref[...] + head_shift_ref[...]     # head BN (eval, folded)
        o_ref[...] = (jnp.dot(pooled, w_head_ref[...],
                              preferred_element_type=jnp.float32)
                      + b_head_ref[...])


def mean_mil_forward(bags, params, *, tn=None, tb=None):
    B, N, F = bags.shape
    Z = params["w_enc"].shape[1]
    n_out = params["w_head"].shape[1]

    # Patch-chunk size: multiple of 8 (sublane) or the full patch axis.
    if tn is None:
        tn = N if N <= 256 else 256
    # Bags per block (sublane packing of the accumulator / head matmul).
    if tb is None:
        tb = min(B, 8)
    assert B % tb == 0, "demo wrapper assumes tb divides B"
    nb = B // tb
    nj = pl.cdiv(N, tn)

    kernel = functools.partial(mean_mil_kernel, n_patches=N, tn=tn)

    return pl.pallas_call(
        kernel,
        out_shape=jax.ShapeDtypeStruct((B, n_out), jnp.float32),
        grid=(nb, nj),
        in_specs=[
            pl.BlockSpec((tb, tn, F), lambda i, j: (i, j, 0)),   # patch chunk
            pl.BlockSpec((F, Z), lambda i, j: (0, 0)),           # w_enc (resident)
            pl.BlockSpec((1, Z), lambda i, j: (0, 0)),           # b_enc
            pl.BlockSpec((1, Z), lambda i, j: (0, 0)),           # enc BN scale
            pl.BlockSpec((1, Z), lambda i, j: (0, 0)),           # enc BN shift
            pl.BlockSpec((1, Z), lambda i, j: (0, 0)),           # head BN scale
            pl.BlockSpec((1, Z), lambda i, j: (0, 0)),           # head BN shift
            pl.BlockSpec((Z, n_out), lambda i, j: (0, 0)),       # w_head
            pl.BlockSpec((1, n_out), lambda i, j: (0, 0)),       # b_head
        ],
        out_specs=pl.BlockSpec((tb, n_out), lambda i, j: (i, 0)),
        scratch_shapes=[pltpu.VMEM((tb, Z), jnp.float32)],       # per-bag sum accumulator
        compiler_params=pltpu.CompilerParams(
            dimension_semantics=("parallel", "arbitrary")),
    )(bags, params["w_enc"], params["b_enc"], params["enc_scale"],
      params["enc_shift"], params["head_scale"], params["head_shift"],
      params["w_head"], params["b_head"])


# ----------------------------------------------------------------------------
# Pure-JAX reference (numerical verification)
# ----------------------------------------------------------------------------
def ref_forward(bags, params):
    B, N, F = bags.shape
    x = bags.reshape(B * N, F)
    y = jnp.maximum(x @ params["w_enc"] + params["b_enc"], 0.0)
    y = y * params["enc_scale"] + params["enc_shift"]
    pooled = y.reshape(B, N, -1).mean(axis=1)
    pooled = pooled * params["head_scale"] + params["head_shift"]
    return pooled @ params["w_head"] + params["b_head"]


# ----------------------------------------------------------------------------
# Deterministic parameter construction (matches PyTorch initialize_weights,
# BatchNorm1d in eval mode right after init: mean=0, var=1, gamma=1, beta=0)
# ----------------------------------------------------------------------------
def make_params(key, n_feats, n_out, z_dim):
    eps = 1e-5
    k_enc, k_head = jax.random.split(key)

    xav = np.sqrt(2.0 / (n_feats + z_dim))
    w_enc = jax.random.normal(k_enc, (n_feats, z_dim), jnp.float32) * xav
    b_enc = jnp.zeros((1, z_dim), jnp.float32)
    enc_scale = jnp.full((1, z_dim), 1.0 / np.sqrt(1.0 + eps), jnp.float32)
    enc_shift = jnp.zeros((1, z_dim), jnp.float32)

    head_scale = jnp.full((1, z_dim), 1.0 / np.sqrt(1.0 + eps), jnp.float32)
    head_shift = jnp.zeros((1, z_dim), jnp.float32)
    xav_h = np.sqrt(2.0 / (z_dim + n_out))
    w_head = jax.random.normal(k_head, (z_dim, n_out), jnp.float32) * xav_h
    b_head = jnp.zeros((1, n_out), jnp.float32)

    return dict(w_enc=w_enc, b_enc=b_enc, enc_scale=enc_scale, enc_shift=enc_shift,
                head_scale=head_scale, head_shift=head_shift,
                w_head=w_head, b_head=b_head)


if __name__ == "__main__":
    # Small shapes, lane/sublane friendly (Z and F on the 128-lane axis).
    B, N, F = 2, 16, 128        # bags, patches per bag, input features
    Z, n_out = 128, 4           # latent dim, classes

    key = jax.random.PRNGKey(0)
    k_bags, k_params = jax.random.split(key)
    bags = jax.random.normal(k_bags, (B, N, F), jnp.float32)
    params = make_params(k_params, F, n_out, Z)

    # tn=8 exercises the multi-chunk reduction path (grid = (1, 2)).
    fwd = jax.jit(functools.partial(mean_mil_forward, tn=8, tb=B))
    scores = fwd(bags, params)
    scores = jax.block_until_ready(scores)

    ref = ref_forward(bags, params)
    np.testing.assert_allclose(np.asarray(scores), np.asarray(ref),
                               rtol=1e-4, atol=1e-5)

    print("KERNEL_OK")
</pallas_src>

<mosaic_0001>
module attributes {stable_mosaic.version = 11 : i64} {
  func.func @mean_mil_kernel(%arg0: i32, %arg1: i32, %arg2: memref<2x8x128xf32, #tpu.memory_space<vmem>>, %arg3: memref<128x128xf32, #tpu.memory_space<vmem>>, %arg4: memref<1x128xf32, #tpu.memory_space<vmem>>, %arg5: memref<1x128xf32, #tpu.memory_space<vmem>>, %arg6: memref<1x128xf32, #tpu.memory_space<vmem>>, %arg7: memref<1x128xf32, #tpu.memory_space<vmem>>, %arg8: memref<1x128xf32, #tpu.memory_space<vmem>>, %arg9: memref<128x4xf32, #tpu.memory_space<vmem>>, %arg10: memref<1x4xf32, #tpu.memory_space<vmem>>, %arg11: memref<2x4xf32, #tpu.memory_space<vmem>>, %arg12: memref<2x128xf32, #tpu.memory_space<vmem>>) attributes {dimension_semantics = [#tpu.dimension_semantics<parallel>, #tpu.dimension_semantics<arbitrary>], iteration_bounds = array<i64: 1, 2>, scalar_prefetch = 0 : i64, scratch_operands = 1 : i64, tpu.core_type = #tpu.core_type<tc>, window_params = [{transform_indices = @transform_0, window_bounds = array<i64: 2, 8, 128>}, {pipeline_mode = #tpu.pipeline_mode<synchronous>, transform_indices = @transform_1, window_bounds = array<i64: 128, 128>}, {pipeline_mode = #tpu.pipeline_mode<synchronous>, transform_indices = @transform_2, window_bounds = array<i64: 1, 128>}, {pipeline_mode = #tpu.pipeline_mode<synchronous>, transform_indices = @transform_3, window_bounds = array<i64: 1, 128>}, {pipeline_mode = #tpu.pipeline_mode<synchronous>, transform_indices = @transform_4, window_bounds = array<i64: 1, 128>}, {pipeline_mode = #tpu.pipeline_mode<synchronous>, transform_indices = @transform_5, window_bounds = array<i64: 1, 128>}, {pipeline_mode = #tpu.pipeline_mode<synchronous>, transform_indices = @transform_6, window_bounds = array<i64: 1, 128>}, {pipeline_mode = #tpu.pipeline_mode<synchronous>, transform_indices = @transform_7, window_bounds = array<i64: 128, 4>}, {pipeline_mode = #tpu.pipeline_mode<synchronous>, transform_indices = @transform_8, window_bounds = array<i64: 1, 4>}, {transform_indices = @transform_9, window_bounds = array<i64: 2, 4>}]} {
    %c0_i32 = arith.constant 0 : i32
    %0 = arith.cmpi eq, %arg1, %c0_i32 : i32
    %1 = arith.extui %0 : i1 to i32
    %c0_i32_0 = arith.constant 0 : i32
    %2 = arith.cmpi ne, %1, %c0_i32_0 : i32
    scf.if %2 {
      %cst_18 = arith.constant 0.000000e+00 : f32
      %26 = vector.broadcast %cst_18 : f32 to vector<2x128xf32>
      %c0_19 = arith.constant 0 : index
      %c0_20 = arith.constant 0 : index
      %27 = vector.load %arg12[%c0_19, %c0_20] : memref<2x128xf32, #tpu.memory_space<vmem>>, vector<2x128xf32>
      tpu.vector_store %arg12[%c0_19, %c0_20], %26 {strides = array<i32>} : memref<2x128xf32, #tpu.memory_space<vmem>>, vector<2x128xf32>,
    } else {
    }
    %c0 = arith.constant 0 : index
    %c0_1 = arith.constant 0 : index
    %c0_2 = arith.constant 0 : index
    %3 = vector.load %arg2[%c0, %c0_1, %c0_2] : memref<2x8x128xf32, #tpu.memory_space<vmem>>, vector<2x8x128xf32>
    %4 = vector.shape_cast %3 : vector<2x8x128xf32> to vector<16x128xf32>
    %c0_3 = arith.constant 0 : index
    %c0_4 = arith.constant 0 : index
    %5 = vector.load %arg3[%c0_3, %c0_4] : memref<128x128xf32, #tpu.memory_space<vmem>>, vector<128x128xf32>
    %cst = arith.constant dense<0.000000e+00> : vector<16x128xf32>
    %6 = tpu.matmul %4, %5, %cst {dimension_numbers = #tpu.dot_dimension_numbers<[1], [0], [0], [1], [0, 0, 1, 1], [], []>} : vector<16x128xf32>, vector<128x128xf32>, vector<16x128xf32> -> vector<16x128xf32>
    %c0_5 = arith.constant 0 : index
    %c0_6 = arith.constant 0 : index
    %7 = vector.load %arg4[%c0_5, %c0_6] : memref<1x128xf32, #tpu.memory_space<vmem>>, vector<1x128xf32>
    %8 = vector.broadcast %7 : vector<1x128xf32> to vector<16x128xf32>
    %9 = arith.addf %6, %8 : vector<16x128xf32>
    %cst_7 = arith.constant 0.000000e+00 : f32
    %10 = vector.broadcast %cst_7 : f32 to vector<16x128xf32>
    %11 = arith.maximumf %9, %10 : vector<16x128xf32>
    %c0_8 = arith.constant 0 : index
    %c0_9 = arith.constant 0 : index
    %12 = vector.load %arg5[%c0_8, %c0_9] : memref<1x128xf32, #tpu.memory_space<vmem>>, vector<1x128xf32>
    %13 = vector.broadcast %12 : vector<1x128xf32> to vector<16x128xf32>
    %14 = arith.mulf %11, %13 : vector<16x128xf32>
    %c0_10 = arith.constant 0 : index
    %c0_11 = arith.constant 0 : index
    %15 = vector.load %arg6[%c0_10, %c0_11] : memref<1x128xf32, #tpu.memory_space<vmem>>, vector<1x128xf32>
    %16 = vector.broadcast %15 : vector<1x128xf32> to vector<16x128xf32>
    %17 = arith.addf %14, %16 : vector<16x128xf32>
    %c0_12 = arith.constant 0 : index
    %c0_13 = arith.constant 0 : index
    %18 = vector.load %arg12[%c0_12, %c0_13] : memref<2x128xf32, #tpu.memory_space<vmem>>, vector<2x128xf32>
    %19 = vector.shape_cast %17 : vector<16x128xf32> to vector<2x8x128xf32>
    %cst_14 = arith.constant dense<0.000000e+00> : vector<2x128xf32>
    %20 = vector.multi_reduction <add>, %19, %cst_14 [1] : vector<2x8x128xf32> to vector<2x128xf32>
    %21 = arith.addf %18, %20 : vector<2x128xf32>
    %c0_15 = arith.constant 0 : index
    %c0_16 = arith.constant 0 : index
    %22 = vector.load %arg12[%c0_15, %c0_16] : memref<2x128xf32, #tpu.memory_space<vmem>>, vector<2x128xf32>
    tpu.vector_store %arg12[%c0_15, %c0_16], %21 {strides = array<i32>} : memref<2x128xf32, #tpu.memory_space<vmem>>, vector<2x128xf32>,
    %c1_i32 = arith.constant 1 : i32
    %23 = arith.cmpi eq, %arg1, %c1_i32 : i32
    %24 = arith.extui %23 : i1 to i32
    %c0_i32_17 = arith.constant 0 : i32
    %25 = arith.cmpi ne, %24, %c0_i32_17 : i32
    scf.if %25 {
      %c0_18 = arith.constant 0 : index
      %c0_19 = arith.constant 0 : index
      %26 = vector.load %arg12[%c0_18, %c0_19] : memref<2x128xf32, #tpu.memory_space<vmem>>, vector<2x128xf32>
      %cst_20 = arith.constant 6.250000e-02 : f32
      %27 = vector.broadcast %cst_20 : f32 to vector<2x128xf32>
      %28 = arith.mulf %26, %27 : vector<2x128xf32>
      %c0_21 = arith.constant 0 : index
      %c0_22 = arith.constant 0 : index
      %29 = vector.load %arg7[%c0_21, %c0_22] : memref<1x128xf32, #tpu.memory_space<vmem>>, vector<1x128xf32>
      %30 = vector.broadcast %29 : vector<1x128xf32> to vector<2x128xf32>
      %31 = arith.mulf %28, %30 : vector<2x128xf32>
      %c0_23 = arith.constant 0 : index
      %c0_24 = arith.constant 0 : index
      %32 = vector.load %arg8[%c0_23, %c0_24] : memref<1x128xf32, #tpu.memory_space<vmem>>, vector<1x128xf32>
      %33 = vector.broadcast %32 : vector<1x128xf32> to vector<2x128xf32>
      %34 = arith.addf %31, %33 : vector<2x128xf32>
      %c0_25 = arith.constant 0 : index
      %c0_26 = arith.constant 0 : index
      %35 = vector.load %arg9[%c0_25, %c0_26] : memref<128x4xf32, #tpu.memory_space<vmem>>, vector<128x4xf32>
      %cst_27 = arith.constant dense<0.000000e+00> : vector<2x4xf32>
      %36 = tpu.matmul %34, %35, %cst_27 {dimension_numbers = #tpu.dot_dimension_numbers<[1], [0], [0], [1], [0, 0, 1, 1], [], []>} : vector<2x128xf32>, vector<128x4xf32>, vector<2x4xf32> -> vector<2x4xf32>
      %c0_28 = arith.constant 0 : index
      %c0_29 = arith.constant 0 : index
      %37 = vector.load %arg10[%c0_28, %c0_29] : memref<1x4xf32, #tpu.memory_space<vmem>>, vector<1x4xf32>
      %38 = vector.broadcast %37 : vector<1x4xf32> to vector<2x4xf32>
      %39 = arith.addf %36, %38 : vector<2x4xf32>
      %c0_30 = arith.constant 0 : index
      %c0_31 = arith.constant 0 : index
      %40 = vector.load %arg11[%c0_30, %c0_31] : memref<2x4xf32, #tpu.memory_space<vmem>>, vector<2x4xf32>
      tpu.vector_store %arg11[%c0_30, %c0_31], %39 {strides = array<i32>} : memref<2x4xf32, #tpu.memory_space<vmem>>, vector<2x4xf32>,
    } else {
    }
    return
  }
  func.func @transform_0(%arg0: i32, %arg1: i32) -> (i32, i32, i32) {
    %c0_i32 = arith.constant 0 : i32
    %c0_i32_0 = arith.constant 0 : i32
    return %arg0, %arg1, %c0_i32 : i32, i32, i32
  }
  func.func @transform_1(%arg0: i32, %arg1: i32) -> (i32, i32) {
    %c0_i32 = arith.constant 0 : i32
    %c0_i32_0 = arith.constant 0 : i32
    %c0_i32_1 = arith.constant 0 : i32
    return %c0_i32, %c0_i32_0 : i32, i32
  }
  func.func @transform_2(%arg0: i32, %arg1: i32) -> (i32, i32) {
    %c0_i32 = arith.constant 0 : i32
    %c0_i32_0 = arith.constant 0 : i32
    %c0_i32_1 = arith.constant 0 : i32
    return %c0_i32, %c0_i32_0 : i32, i32
  }
  func.func @transform_3(%arg0: i32, %arg1: i32) -> (i32, i32) {
    %c0_i32 = arith.constant 0 : i32
    %c0_i32_0 = arith.constant 0 : i32
    %c0_i32_1 = arith.constant 0 : i32
    return %c0_i32, %c0_i32_0 : i32, i32
  }
  func.func @transform_4(%arg0: i32, %arg1: i32) -> (i32, i32) {
    %c0_i32 = arith.constant 0 : i32
    %c0_i32_0 = arith.constant 0 : i32
    %c0_i32_1 = arith.constant 0 : i32
    return %c0_i32, %c0_i32_0 : i32, i32
  }
  func.func @transform_5(%arg0: i32, %arg1: i32) -> (i32, i32) {
    %c0_i32 = arith.constant 0 : i32
    %c0_i32_0 = arith.constant 0 : i32
    %c0_i32_1 = arith.constant 0 : i32
    return %c0_i32, %c0_i32_0 : i32, i32
  }
  func.func @transform_6(%arg0: i32, %arg1: i32) -> (i32, i32) {
    %c0_i32 = arith.constant 0 : i32
    %c0_i32_0 = arith.constant 0 : i32
    %c0_i32_1 = arith.constant 0 : i32
    return %c0_i32, %c0_i32_0 : i32, i32
  }
  func.func @transform_7(%arg0: i32, %arg1: i32) -> (i32, i32) {
    %c0_i32 = arith.constant 0 : i32
    %c0_i32_0 = arith.constant 0 : i32
    %c0_i32_1 = arith.constant 0 : i32
    return %c0_i32, %c0_i32_0 : i32, i32
  }
  func.func @transform_8(%arg0: i32, %arg1: i32) -> (i32, i32) {
    %c0_i32 = arith.constant 0 : i32
    %c0_i32_0 = arith.constant 0 : i32
    %c0_i32_1 = arith.constant 0 : i32
    return %c0_i32, %c0_i32_0 : i32, i32
  }
  func.func @transform_9(%arg0: i32, %arg1: i32) -> (i32, i32) {
    %c0_i32 = arith.constant 0 : i32
    %c0_i32_0 = arith.constant 0 : i32
    return %arg0, %c0_i32 : i32, i32
  }
}

</mosaic_0001>

<llo_original>
// kernel: mean_mil_forward.1
$region0: #{mean_mil_forward.1}
  #allocation0 [shape = 'u32[]', space=smem, size = 0x4, offset = 0x4, fixed_abs, tag = 'smem constant byte address 0x4 - core index']
  #allocation1 [shape = 'u32[144,128]{1,0:T(1,128)}', space=vmem, size = 0x12000, scoped, tag = 'internal scratch']
  #allocation2 [shape = 'f32[2,128]{1,0:T(2,128)}', space=vmem, size = 0x400, scoped, tag = 'scratch operand']
  %s0 = inlined_call_operand.hbm [shape: f32[2,16,128], index: 0, kind: input, shape index: {}]
  %s1 = inlined_call_operand.vmem [shape: f32[128,128], index: 1, kind: input, shape index: {}]
  %s2 = inlined_call_operand.vmem [shape: f32[1,128], index: 2, kind: input, shape index: {}]
  %s3 = inlined_call_operand.vmem [shape: f32[1,128], index: 3, kind: input, shape index: {}]
  %s4 = inlined_call_operand.vmem [shape: f32[1,128], index: 4, kind: input, shape index: {}]
  %s5 = inlined_call_operand.vmem [shape: f32[1,128], index: 5, kind: input, shape index: {}]
  %s6 = inlined_call_operand.vmem [shape: f32[1,128], index: 6, kind: input, shape index: {}]
  %s7 = inlined_call_operand.vmem [shape: f32[128,4], index: 7, kind: input, shape index: {}]
  %s8 = inlined_call_operand.vmem [shape: f32[1,4], index: 8, kind: input, shape index: {}]
  %s9 = inlined_call_operand.hbm [shape: f32[2,4], index: 9, kind: output, shape index: {}]
  %s10 = sld [smem:[#allocation0]]
  $region81: #{mean_mil_forward.1} parent=0
    _
  %s12 = ssub.s32 1, %s10
  %s13 = scalar_select 0, %s12, %s10
  $region1: #{mean_mil_forward.1} parent=0
    #allocation3 [shape = 'u8[16384]{0}', space=vmem, size = 0x4000, scoped, tag = 'input window, operand 0']
    #allocation4 [shape = 's32[2]{0}', space=sflag, size = 0x8, scoped, tag = 'scoped memory for mean_mil_forward.1']
    #allocation5 [shape = 's32[2]{0}', space=sflag, size = 0x8, scoped, tag = 'scoped memory for mean_mil_forward.1']
    #allocation6 [shape = 'u8[1024]{0}', space=vmem, size = 0x400, scoped, tag = 'output window, operand 0, single buffered']
    %14 = vsyncpa [#allocation4], 0
    %s15 = scalar_lea.sflag [#allocation4], 1
    %16 = vsyncpa %s15, 0
    %17 = vsyncpa [#allocation5], 0
    loop: start=0, step=1, limit=4
    $region2: #{mean_mil_forward.1} parent=1 // loop_pre_header
      _
    $region3: #{mean_mil_forward.1} parent=1 // loop_header
      %s19 = sphi 0, %s23
      %p20 = scmp.ge.s32.totalorder %s19, 4
      %s26 = sphi 0, %s38
      %s27 = sphi 0, %s34
      %s28 = sphi 0, %s26
      %s29 = sphi 0, %s27
      %s30 = sphi 0, %s28
      %s31 = sphi 0, %s29
      %s43 = sphi 0, %s45
      %s46 = sphi 0, %s43
      %s47 = sphi 0, %s46
      %s63 = sphi 0, %s47
      %s67 = sphi 0, %s67
      %s69 = sphi 0, %s67
      %s70 = sphi 0, %s69
      %s84 = sphi 0, %s70
      %s88 = sphi 0, %s88
      %s90 = sphi 0, %s88
      %s91 = sphi 0, %s90
      %s105 = sphi 0, %s91
      %s109 = sphi 0, %s109
      %s111 = sphi 0, %s109
      %s112 = sphi 0, %s111
      %s126 = sphi 0, %s112
      %s130 = sphi 0, %s130
      %s132 = sphi 0, %s130
      %s133 = sphi 0, %s132
      %s147 = sphi 0, %s133
      %s151 = sphi 0, %s151
      %s153 = sphi 0, %s151
      %s154 = sphi 0, %s153
      %s168 = sphi 0, %s154
      %s172 = sphi 0, %s172
      %s174 = sphi 0, %s172
      %s175 = sphi 0, %s174
      %s189 = sphi 0, %s175
      %s193 = sphi 0, %s193
      %s195 = sphi 0, %s193
      %s196 = sphi 0, %s195
      %s210 = sphi 0, %s196
      %s214 = sphi 0, %s214
      %s216 = sphi 0, %s214
      %s217 = sphi 0, %s216
      %s231 = sphi 0, %s217
      %s237 = sphi 0, %s239
      %s240 = sphi 0, %s237
      %s241 = sphi 0, %s240
      %s257 = sphi 0, %s241
    $region4: #{mean_mil_forward.1} parent=1 // loop_header_branch
      %22 = sbr.rel (%p20) target = $region8
    $region5: #{mean_mil_forward.1} parent=1 // loop_body
      %s24 = ssub.s32 %s19, 1
      %s25 = ssub.s32 %s19, 2
      %s32 = sadd.s32 1, %s27
      %p33 = scmp.ge.s32.totalorder %s32, 2
      %s34 = scalar_select %p33, 0, %s32
      %s35 = sadd.s32 1, %s26
      %s36 = scalar_select %p33, %s35, %s26
      %p37 = scmp.ge.s32.totalorder %s36, 1
      %s38 = scalar_select %p37, 0, %s36
      %s39 = ssub.s32 %s26, %s38
      %s40 = ssub.s32 %s27, %s34
      %s41 = sor.u32 %s39, %s40
      %p42 = scmp.eq.s32.totalorder %s41, 0
      %s44 = sadd.s32 %s43, 1
      %s45 = scalar_select %p42, %s43, %s44
      %p48 = pneg %p42
      %p49 = scmp.eq.s32.totalorder %s19, 1
      %p50 = por %p48, %p49
      %p51 = scmp.ne.s32.totalorder %s43, %s46
      %p52 = scmp.eq.s32.totalorder %s19, 0
      %p53 = por %p51, %p52
      %p54 = scmp.ne.s32.totalorder %s43, %s46
      %p55 = scmp.eq.s32.totalorder %s24, 1
      %p56 = por %p54, %p55
      %p57 = scmp.ne.s32.totalorder %s46, %s47
      %p58 = scmp.eq.s32.totalorder %s24, 0
      %p59 = por %p57, %p58
      %p60 = scmp.ne.s32.totalorder %s46, %s47
      %p61 = scmp.eq.s32.totalorder %s25, 1
      %p62 = por %p60, %p61
      %p64 = scmp.ne.s32.totalorder %s47, %s63
      %p65 = scmp.eq.s32.totalorder %s25, 0
      %p66 = por %p64, %p65
      %s68 = sadd.s32 %s67, 1
      %p71 = scmp.eq.s32.totalorder %s19, 1
      %p72 = scmp.ne.s32.totalorder %s67, %s69
      %p73 = scmp.eq.s32.totalorder %s19, 0
      %p74 = por %p72, %p73
      %p75 = scmp.ne.s32.totalorder %s67, %s69
      %p76 = scmp.eq.s32.totalorder %s24, 1
      %p77 = por %p75, %p76
      %p78 = scmp.ne.s32.totalorder %s69, %s70
      %p79 = scmp.eq.s32.totalorder %s24, 0
      %p80 = por %p78, %p79
      %p81 = scmp.ne.s32.totalorder %s69, %s70
      %p82 = scmp.eq.s32.totalorder %s25, 1
      %p83 = por %p81, %p82
      %p85 = scmp.ne.s32.totalorder %s70, %s84
      %p86 = scmp.eq.s32.totalorder %s25, 0
      %p87 = por %p85, %p86
      %s89 = sadd.s32 %s88, 1
      %p92 = scmp.eq.s32.totalorder %s19, 1
      %p93 = scmp.ne.s32.totalorder %s88, %s90
      %p94 = scmp.eq.s32.totalorder %s19, 0
      %p95 = por %p93, %p94
      %p96 = scmp.ne.s32.totalorder %s88, %s90
      %p97 = scmp.eq.s32.totalorder %s24, 1
      %p98 = por %p96, %p97
      %p99 = scmp.ne.s32.totalorder %s90, %s91
      %p100 = scmp.eq.s32.totalorder %s24, 0
      %p101 = por %p99, %p100
      %p102 = scmp.ne.s32.totalorder %s90, %s91
      %p103 = scmp.eq.s32.totalorder %s25, 1
      %p104 = por %p102, %p103
      %p106 = scmp.ne.s32.totalorder %s91, %s105
      %p107 = scmp.eq.s32.totalorder %s25, 0
      %p108 = por %p106, %p107
      %s110 = sadd.s32 %s109, 1
      %p113 = scmp.eq.s32.totalorder %s19, 1
      %p114 = scmp.ne.s32.totalorder %s109, %s111
      %p115 = scmp.eq.s32.totalorder %s19, 0
      %p116 = por %p114, %p115
      %p117 = scmp.ne.s32.totalorder %s109, %s111
      %p118 = scmp.eq.s32.totalorder %s24, 1
      %p119 = por %p117, %p118
      %p120 = scmp.ne.s32.totalorder %s111, %s112
      %p121 = scmp.eq.s32.totalorder %s24, 0
      %p122 = por %p120, %p121
      %p123 = scmp.ne.s32.totalorder %s111, %s112
      %p124 = scmp.eq.s32.totalorder %s25, 1
      %p125 = por %p123, %p124
      %p127 = scmp.ne.s32.totalorder %s112, %s126
      %p128 = scmp.eq.s32.totalorder %s25, 0
      %p129 = por %p127, %p128
      %s131 = sadd.s32 %s130, 1
      %p134 = scmp.eq.s32.totalorder %s19, 1
      %p135 = scmp.ne.s32.totalorder %s130, %s132
      %p136 = scmp.eq.s32.totalorder %s19, 0
      %p137 = por %p135, %p136
      %p138 = scmp.ne.s32.totalorder %s130, %s132
      %p139 = scmp.eq.s32.totalorder %s24, 1
      %p140 = por %p138, %p139
      %p141 = scmp.ne.s32.totalorder %s132, %s133
      %p142 = scmp.eq.s32.totalorder %s24, 0
      %p143 = por %p141, %p142
      %p144 = scmp.ne.s32.totalorder %s132, %s133
      %p145 = scmp.eq.s32.totalorder %s25, 1
      %p146 = por %p144, %p145
      %p148 = scmp.ne.s32.totalorder %s133, %s147
      %p149 = scmp.eq.s32.totalorder %s25, 0
      %p150 = por %p148, %p149
      %s152 = sadd.s32 %s151, 1
      %p155 = scmp.eq.s32.totalorder %s19, 1
      %p156 = scmp.ne.s32.totalorder %s151, %s153
      %p157 = scmp.eq.s32.totalorder %s19, 0
      %p158 = por %p156, %p157
      %p159 = scmp.ne.s32.totalorder %s151, %s153
      %p160 = scmp.eq.s32.totalorder %s24, 1
      %p161 = por %p159, %p160
      %p162 = scmp.ne.s32.totalorder %s153, %s154
      %p163 = scmp.eq.s32.totalorder %s24, 0
      %p164 = por %p162, %p163
      %p165 = scmp.ne.s32.totalorder %s153, %s154
      %p166 = scmp.eq.s32.totalorder %s25, 1
      %p167 = por %p165, %p166
      %p169 = scmp.ne.s32.totalorder %s154, %s168
      %p170 = scmp.eq.s32.totalorder %s25, 0
      %p171 = por %p169, %p170
      %s173 = sadd.s32 %s172, 1
      %p176 = scmp.eq.s32.totalorder %s19, 1
      %p177 = scmp.ne.s32.totalorder %s172, %s174
      %p178 = scmp.eq.s32.totalorder %s19, 0
      %p179 = por %p177, %p178
      %p180 = scmp.ne.s32.totalorder %s172, %s174
      %p181 = scmp.eq.s32.totalorder %s24, 1
      %p182 = por %p180, %p181
      %p183 = scmp.ne.s32.totalorder %s174, %s175
      %p184 = scmp.eq.s32.totalorder %s24, 0
      %p185 = por %p183, %p184
      %p186 = scmp.ne.s32.totalorder %s174, %s175
      %p187 = scmp.eq.s32.totalorder %s25, 1
      %p188 = por %p186, %p187
      %p190 = scmp.ne.s32.totalorder %s175, %s189
      %p191 = scmp.eq.s32.totalorder %s25, 0
      %p192 = por %p190, %p191
      %s194 = sadd.s32 %s193, 1
      %p197 = scmp.eq.s32.totalorder %s19, 1
      %p198 = scmp.ne.s32.totalorder %s193, %s195
      %p199 = scmp.eq.s32.totalorder %s19, 0
      %p200 = por %p198, %p199
      %p201 = scmp.ne.s32.totalorder %s193, %s195
      %p202 = scmp.eq.s32.totalorder %s24, 1
      %p203 = por %p201, %p202
      %p204 = scmp.ne.s32.totalorder %s195, %s196
      %p205 = scmp.eq.s32.totalorder %s24, 0
      %p206 = por %p204, %p205
      %p207 = scmp.ne.s32.totalorder %s195, %s196
      %p208 = scmp.eq.s32.totalorder %s25, 1
      %p209 = por %p207, %p208
      %p211 = scmp.ne.s32.totalorder %s196, %s210
      %p212 = scmp.eq.s32.totalorder %s25, 0
      %p213 = por %p211, %p212
      %s215 = sadd.s32 %s214, 1
      %p218 = scmp.eq.s32.totalorder %s19, 1
      %p219 = scmp.ne.s32.totalorder %s214, %s216
      %p220 = scmp.eq.s32.totalorder %s19, 0
      %p221 = por %p219, %p220
      %p222 = scmp.ne.s32.totalorder %s214, %s216
      %p223 = scmp.eq.s32.totalorder %s24, 1
      %p224 = por %p222, %p223
      %p225 = scmp.ne.s32.totalorder %s216, %s217
      %p226 = scmp.eq.s32.totalorder %s24, 0
      %p227 = por %p225, %p226
      %p228 = scmp.ne.s32.totalorder %s216, %s217
      %p229 = scmp.eq.s32.totalorder %s25, 1
      %p230 = por %p228, %p229
      %p232 = scmp.ne.s32.totalorder %s217, %s231
      %p233 = scmp.eq.s32.totalorder %s25, 0
      %p234 = por %p232, %p233
      %s235 = ssub.s32 %s26, %s38
      %p236 = scmp.eq.s32.totalorder %s235, 0
      %s238 = sadd.s32 %s237, 1
      %s239 = scalar_select %p236, %s237, %s238
      %p242 = pneg %p236
      %p243 = scmp.eq.s32.totalorder %s19, 1
      %p244 = por %p242, %p243
      %p245 = scmp.ne.s32.totalorder %s237, %s240
      %p246 = scmp.eq.s32.totalorder %s19, 0
      %p247 = por %p245, %p246
      %p248 = scmp.ne.s32.totalorder %s237, %s240
      %p249 = scmp.eq.s32.totalorder %s24, 1
      %p250 = por %p248, %p249
      %p251 = scmp.ne.s32.totalorder %s240, %s241
      %p252 = scmp.eq.s32.totalorder %s24, 0
      %p253 = por %p251, %p252
      %p254 = scmp.ne.s32.totalorder %s240, %s241
      %p255 = scmp.eq.s32.totalorder %s25, 1
      %p256 = por %p254, %p255
      %p258 = scmp.ne.s32.totalorder %s241, %s257
      %p259 = scmp.eq.s32.totalorder %s25, 0
      %p260 = por %p258, %p259
      %p261 = scmp.le.s32.totalorder 1, %s19
      %p262 = scmp.lt.s32.totalorder %s19, 3
      %p263 = pnand %p261, %p262
      %p264 = pneg %p263
      // Predicated region
      $region9: #{mean_mil_forward.1} parent=5 // pred_check
        _
      $region10: #{mean_mil_forward.1} parent=5 // pred_check_branch
        %266 = sbr.rel (%p263) target = $region12
      $region11: #{mean_mil_forward.1} parent=5 // pred_region
        %s267 = ssub.s32 %s19, 1
        // Predicated region
        $region13: #{mean_mil_forward.1} parent=11 // pred_check
          %p268 = pneg %p80
        $region14: #{mean_mil_forward.1} parent=11 // pred_check_branch
          %270 = sbr.rel (%p268) target = $region16
        $region15: #{mean_mil_forward.1} parent=11 // pred_region
          _
        $region16: #{mean_mil_forward.1} parent=11 // pred_fallthru
          _
        // Predicated region
        $region17: #{mean_mil_forward.1} parent=11 // pred_check
          %p271 = pneg %p101
        $region18: #{mean_mil_forward.1} parent=11 // pred_check_branch
          %273 = sbr.rel (%p271) target = $region20
        $region19: #{mean_mil_forward.1} parent=11 // pred_region
          _
        $region20: #{mean_mil_forward.1} parent=11 // pred_fallthru
          _
        // Predicated region
        $region21: #{mean_mil_forward.1} parent=11 // pred_check
          %p274 = pneg %p122
        $region22: #{mean_mil_forward.1} parent=11 // pred_check_branch
          %276 = sbr.rel (%p274) target = $region24
        $region23: #{mean_mil_forward.1} parent=11 // pred_region
          _
        $region24: #{mean_mil_forward.1} parent=11 // pred_fallthru
          _
        // Predicated region
        $region25: #{mean_mil_forward.1} parent=11 // pred_check
          %p277 = pneg %p143
        $region26: #{mean_mil_forward.1} parent=11 // pred_check_branch
          %279 = sbr.rel (%p277) target = $region28
        $region27: #{mean_mil_forward.1} parent=11 // pred_region
          _
        $region28: #{mean_mil_forward.1} parent=11 // pred_fallthru
          _
        // Predicated region
        $region29: #{mean_mil_forward.1} parent=11 // pred_check
          %p280 = pneg %p164
        $region30: #{mean_mil_forward.1} parent=11 // pred_check_branch
          %282 = sbr.rel (%p280) target = $region32
        $region31: #{mean_mil_forward.1} parent=11 // pred_region
          _
        $region32: #{mean_mil_forward.1} parent=11 // pred_fallthru
          _
        // Predicated region
        $region33: #{mean_mil_forward.1} parent=11 // pred_check
          %p283 = pneg %p185
        $region34: #{mean_mil_forward.1} parent=11 // pred_check_branch
          %285 = sbr.rel (%p283) target = $region36
        $region35: #{mean_mil_forward.1} parent=11 // pred_region
          _
        $region36: #{mean_mil_forward.1} parent=11 // pred_fallthru
          _
        // Predicated region
        $region37: #{mean_mil_forward.1} parent=11 // pred_check
          %p286 = pneg %p206
        $region38: #{mean_mil_forward.1} parent=11 // pred_check_branch
          %288 = sbr.rel (%p286) target = $region40
        $region39: #{mean_mil_forward.1} parent=11 // pred_region
          _
        $region40: #{mean_mil_forward.1} parent=11 // pred_fallthru
          _
        // Predicated region
        $region41: #{mean_mil_forward.1} parent=11 // pred_check
          %p289 = pneg %p227
        $region42: #{mean_mil_forward.1} parent=11 // pred_check_branch
          %291 = sbr.rel (%p289) target = $region44
        $region43: #{mean_mil_forward.1} parent=11 // pred_region
          _
        $region44: #{mean_mil_forward.1} parent=11 // pred_fallthru
          _
      $region12: #{mean_mil_forward.1} parent=5 // pred_fallthru
        _
      %p292 = scmp.lt.s32.totalorder %s19, 2
      // Predicated region
      $region45: #{mean_mil_forward.1} parent=5 // pred_check
        %p293 = pneg %p292
      $region46: #{mean_mil_forward.1} parent=5 // pred_check_branch
        %295 = sbr.rel (%p293) target = $region48
      $region47: #{mean_mil_forward.1} parent=5 // pred_region
        // Predicated region
        $region49: #{mean_mil_forward.1} parent=47 // pred_check
          %p296 = pneg %p53
        $region50: #{mean_mil_forward.1} parent=47 // pred_check_branch
          %298 = sbr.rel (%p296) target = $region52
        $region51: #{mean_mil_forward.1} parent=47 // pred_region
          %s299 = sand.u32 %s43, 1
          %s300 = scalar_lea.sflag [#allocation4], %s299
          %s301 = sand.u32 %s43, 1
          %s302 = smul.addr %s301, 16
          %s303 = scalar_lea.vmem [#allocation3], %s302
          %s304 = smul.u32 2, %s26
          %s306 = ssub.s32 256, 256
          %307 = vsyncadd %s300, %s306
          %s308 = smul.addr %s304, 2
          %s309 = sadd.s32 %s27, %s308
          %s310 = smul.addr %s309, 128
          %s311 = scalar_lea.hbm %s0, %s310
          %s312 = sshll.u32 %s303, 4
          %s313 = int_to_ptr.vmem [resolvable:$true] %s312
          %318 = dma.hbm_to_vmem [thread:$0]  %s311, 256, %s313, %s300, 256, 128, 8
        $region52: #{mean_mil_forward.1} parent=47 // pred_fallthru
          _
      $region48: #{mean_mil_forward.1} parent=5 // pred_fallthru
        _
      %p319 = scmp.le.s32.totalorder 1, %s19
      %p320 = scmp.lt.s32.totalorder %s19, 3
      %p321 = pnand %p319, %p320
      %p322 = pneg %p321
      // Predicated region
      $region53: #{mean_mil_forward.1} parent=5 // pred_check
        _
      $region54: #{mean_mil_forward.1} parent=5 // pred_check_branch
        %324 = sbr.rel (%p321) target = $region56
      $region55: #{mean_mil_forward.1} parent=5 // pred_region
        %s325 = ssub.s32 %s19, 1
        %s326 = sand.u32 %s46, 1
        %s327 = scalar_lea.sflag [#allocation4], %s326
        %s328 = sand.u32 %s46, 1
        %s329 = smul.addr %s328, 16
        %s330 = scalar_lea.vmem [#allocation3], %s329
        // Predicated region
        $region57: #{mean_mil_forward.1} parent=55 // pred_check
          %p331 = pneg %p59
        $region58: #{mean_mil_forward.1} parent=55 // pred_check_branch
          %333 = sbr.rel (%p331) target = $region60
        $region59: #{mean_mil_forward.1} parent=55 // pred_region
          %334 = dma.done %s327, 256
        $region60: #{mean_mil_forward.1} parent=55 // pred_fallthru
          _
        %s335 = sand.u32 %s46, 1
        %s336 = scalar_lea.sflag [#allocation4], %s335
        %s337 = sand.u32 %s46, 1
        %s338 = smul.addr %s337, 16
        %s339 = scalar_lea.vmem [#allocation3], %s338
        %p340 = pneg %p59
        %p341 = pneg %p56
        %p342 = pneg %p80
        %p343 = pneg %p77
        %p344 = pneg %p101
        %p345 = pneg %p98
        %p346 = pneg %p122
        %p347 = pneg %p119
        %p348 = pneg %p143
        %p349 = pneg %p140
        %p350 = pneg %p164
        %p351 = pneg %p161
        %p352 = pneg %p185
        %p353 = pneg %p182
        %p354 = pneg %p206
        %p355 = pneg %p203
        %p356 = pneg %p227
        %p357 = pneg %p224
        %p358 = pneg %p253
        %p359 = pneg %p250
        %s360 = smul.u32 2, %s28
        %p361 = scmp.eq.s32.totalorder %s29, 0
        // Predicated region
        $region61: #{mean_mil_forward.1} parent=55 // pred_check
          %p362 = pneg %p361
        $region62: #{mean_mil_forward.1} parent=55 // pred_check_branch
          %364 = sbr.rel (%p362) target = $region64
        $region63: #{mean_mil_forward.1} parent=55 // pred_region
          %365 = vst [vmem:[#allocation2] sm:$0x3] 0.0
        $region64: #{mean_mil_forward.1} parent=55 // pred_fallthru
          _
        %v366 = vld [vmem:[%s330] sm:$0xff]
        %v367 = vld [vmem:[%s330 + $0x8] sm:$0xff]
        %v368 = vld [vmem:[%s1] sm:$0xff]
        %v369 = vld [vmem:[%s1 + $0x8] sm:$0xff]
        %v370 = vld [vmem:[%s1 + $0x10] sm:$0xff]
        %v371 = vld [vmem:[%s1 + $0x18] sm:$0xff]
        %v372 = vld [vmem:[%s1 + $0x20] sm:$0xff]
        %v373 = vld [vmem:[%s1 + $0x28] sm:$0xff]
        %v374 = vld [vmem:[%s1 + $0x30] sm:$0xff]
        %v375 = vld [vmem:[%s1 + $0x38] sm:$0xff]
        %v376 = vld [vmem:[%s1 + $0x40] sm:$0xff]
        %v377 = vld [vmem:[%s1 + $0x48] sm:$0xff]
        %v378 = vld [vmem:[%s1 + $0x50] sm:$0xff]
        %v379 = vld [vmem:[%s1 + $0x58] sm:$0xff]
        %v380 = vld [vmem:[%s1 + $0x60] sm:$0xff]
        %v381 = vld [vmem:[%s1 + $0x68] sm:$0xff]
        %v382 = vld [vmem:[%s1 + $0x70] sm:$0xff]
        %v383 = vld [vmem:[%s1 + $0x78] sm:$0xff]
        %v384 = vld [vmem:[%s2] sm:$0x1]
        %v386 = vlaneseq
        %v387 = vshrl.u32 %v386, 7
        %v388 = vsub.s32 0, %v387
        %v389 = vrot.slane %v384, %v388
        %391 = vmatprep.subr.mxu0 0.0
        %392 = vmatpush1.msra.mxu0 %v368
        %393 = vmatprep.subr.mxu0 0.0
        %394 = vmatpush1.msra.mxu0 %v369
        %395 = vmatprep.subr.mxu0 0.0
        %396 = vmatpush1.msra.mxu0 %v370
        %397 = vmatprep.subr.mxu0 0.0
        %398 = vmatpush1.msra.mxu0 %v371
        %399 = vmatprep.subr.mxu0 0.0
        %400 = vmatpush1.msra.mxu0 %v372
        %401 = vmatprep.subr.mxu0 0.0
        %402 = vmatpush1.msra.mxu0 %v373
        %403 = vmatprep.subr.mxu0 0.0
        %404 = vmatpush1.msra.mxu0 %v374
        %405 = vmatprep.subr.mxu0 0.0
        %406 = vmatpush1.msra.mxu0 %v375
        %407 = vmatprep.subr.mxu0 0.0
        %408 = vmatpush1.msra.mxu0 %v376
        %409 = vmatprep.subr.mxu0 0.0
        %410 = vmatpush1.msra.mxu0 %v377
        %411 = vmatprep.subr.mxu0 0.0
        %412 = vmatpush1.msra.mxu0 %v378
        %413 = vmatprep.subr.mxu0 0.0
        %414 = vmatpush1.msra.mxu0 %v379
        %415 = vmatprep.subr.mxu0 0.0
        %416 = vmatpush1.msra.mxu0 %v380
        %417 = vmatprep.subr.mxu0 0.0
        %418 = vmatpush1.msra.mxu0 %v381
        %419 = vmatprep.subr.mxu0 0.0
        %420 = vmatpush1.msra.mxu0 %v382
        %421 = vmatprep.subr.mxu0 0.0
        %422 = vmatpush1.msra.mxu0 %v383
        %423 = vmatprep.subr.mxu0 0.0
        %424 = vmatpush1.msra.mxu0 0.0
        %425 = vmatprep.subr.mxu0 0.0
        %426 = vmatpush1.msra.mxu0 0.0
        %427 = vmatprep.subr.mxu0 0.0
        %428 = vmatpush1.msra.mxu0 0.0
        %429 = vmatprep.subr.mxu0 0.0
        %430 = vmatpush1.msra.mxu0 0.0
        %431 = vmatprep.subr.mxu0 0.0
        %432 = vmatpush1.msra.mxu0 0.0
        %433 = vmatprep.subr.mxu0 0.0
        %434 = vmatpush1.msra.mxu0 0.0
        %435 = vmatprep.subr.mxu0 0.0
        %436 = vmatpush1.msra.mxu0 0.0
        %437 = vmatprep.subr.mxu0 0.0
        %438 = vmatpush1.msra.mxu0 0.0
        %439 = vmatprep.subr.mxu0 0.0
        %440 = vmatpush1.msra.mxu0 0.0
        %441 = vmatprep.subr.mxu0 0.0
        %442 = vmatpush1.msra.mxu0 0.0
        %443 = vmatprep.subr.mxu0 0.0
        %444 = vmatpush1.msra.mxu0 0.0
        %445 = vmatprep.subr.mxu0 0.0
        %446 = vmatpush1.msra.mxu0 0.0
        %447 = vmatprep.subr.mxu0 0.0
        %448 = vmatpush1.msra.mxu0 0.0
        %449 = vmatprep.subr.mxu0 0.0
        %450 = vmatpush1.msra.mxu0 0.0
        %451 = vmatprep.subr.mxu0 0.0
        %452 = vmatpush1.msra.mxu0 0.0
        %453 = vmatprep.subr.mxu0 0.0
        %454 = vmatpush1.msra.mxu0 0.0
        %455 = vmatprep.mubr.f32.mxu0 0.0
        %456 = vmatmul.mubr.f32.gmra.mrb[0].mxu0 %v366
        %v457 = vpop.f32.mrb[0].mxu0
        %v458 = vadd.f32 %v389, %v457
        %v459 = vpop.f32.mrb[0].mxu0
        %460 = vmatprep.mubr.f32.mxu0 0.0
        %461 = vmatmul.mubr.f32.gmra.mrb[0].mxu0 %v367
        %v462 = vpop.f32.mrb[0].mxu0
        %v463 = vadd.f32 %v389, %v462
        %v464 = vpop.f32.mrb[0].mxu0
        %465 = vdwg.mxu0
        %v466 = vmax.f32 %v458, 0.0
        %v467 = vmax.f32 %v463, 0.0
        %v468 = vld [vmem:[%s3] sm:$0x1]
        %v470 = vlaneseq
        %v471 = vshrl.u32 %v470, 7
        %v472 = vsub.s32 0, %v471
        %v473 = vrot.slane %v468, %v472
        %v475 = vmul.f32 %v466, %v473
        %v476 = vmul.f32 %v467, %v473
        %v477 = vld [vmem:[%s4] sm:$0x1]
        %v479 = vlaneseq
        %v480 = vshrl.u32 %v479, 7
        %v481 = vsub.s32 0, %v480
        %v482 = vrot.slane %v477, %v481
        %v484 = vadd.f32 %v475, %v482
        %v485 = vadd.f32 %v476, %v482
        %v486 = vld [vmem:[#allocation2] sm:$0x3]
        %v487 = vrot.slane %v484, 4
        %v488 = vadd.f32 %v484, %v487
        %v489 = vrot.slane %v488, 2
        %v490 = vadd.f32 %v488, %v489
        %v491 = vrot.slane %v490, 1
        %v492 = vadd.f32 %v490, %v491
        %v493 = vrot.slane %v485, 4
        %v494 = vadd.f32 %v485, %v493
        %v495 = vrot.slane %v494, 2
        %v496 = vadd.f32 %v494, %v495
        %v497 = vrot.slane %v496, 1
        %v498 = vadd.f32 %v496, %v497
        %vm501 = vcmask 1041409
        %v502 = vsel %vm501, %v498, %v492
        %v504 = vadd.f32 %v486, %v502
        %505 = vst [vmem:[#allocation2] sm:$0x3] %v504
        %p506 = scmp.eq.s32.totalorder %s29, 1
        // Predicated region
        $region65: #{mean_mil_forward.1} parent=55 // pred_check
          %p507 = pneg %p506
        $region66: #{mean_mil_forward.1} parent=55 // pred_check_branch
          %509 = sbr.rel (%p507) target = $region68
        $region67: #{mean_mil_forward.1} parent=55 // pred_region
          %v510 = vld [vmem:[#allocation2] sm:$0x3]
          %v511 = vmul.f32 %v510, 0.0625
          %v512 = vld [vmem:[%s5] sm:$0x1]
          %v514 = vlaneseq
          %v515 = vshrl.u32 %v514, 7
          %v516 = vsub.s32 0, %v515
          %v517 = vrot.slane %v512, %v516
          %v519 = vmul.f32 %v511, %v517
          %v520 = vld [vmem:[%s6] sm:$0x1]
          %v522 = vlaneseq
          %v523 = vshrl.u32 %v522, 7
          %v524 = vsub.s32 0, %v523
          %v525 = vrot.slane %v520, %v524
          %v527 = vadd.f32 %v519, %v525
          %v528 = vld [vmem:[%s7] sm:$0xff]
          %v529 = vld [vmem:[%s7 + $0x8] sm:$0xff]
          %v530 = vld [vmem:[%s7 + $0x10] sm:$0xff]
          %v531 = vld [vmem:[%s7 + $0x18] sm:$0xff]
          %v532 = vld [vmem:[%s7 + $0x20] sm:$0xff]
          %v533 = vld [vmem:[%s7 + $0x28] sm:$0xff]
          %v534 = vld [vmem:[%s7 + $0x30] sm:$0xff]
          %v535 = vld [vmem:[%s7 + $0x38] sm:$0xff]
          %v536 = vld [vmem:[%s7 + $0x40] sm:$0xff]
          %v537 = vld [vmem:[%s7 + $0x48] sm:$0xff]
          %v538 = vld [vmem:[%s7 + $0x50] sm:$0xff]
          %v539 = vld [vmem:[%s7 + $0x58] sm:$0xff]
          %v540 = vld [vmem:[%s7 + $0x60] sm:$0xff]
          %v541 = vld [vmem:[%s7 + $0x68] sm:$0xff]
          %v542 = vld [vmem:[%s7 + $0x70] sm:$0xff]
          %v543 = vld [vmem:[%s7 + $0x78] sm:$0xff]
          %v544 = vld [vmem:[%s8] sm:$0x1]
          %v546 = vlaneseq
          %v547 = vshrl.u32 %v546, 7
          %v548 = vsub.s32 0, %v547
          %v549 = vrot.slane %v544, %v548
          %551 = vmatprep.subr.mxu0 0.0
          %552 = vmatpush1.msra.mxu0 %v528
          %553 = vmatprep.subr.mxu0 0.0
          %554 = vmatpush1.msra.mxu0 %v529
          %555 = vmatprep.subr.mxu0 0.0
          %556 = vmatpush1.msra.mxu0 %v530
          %557 = vmatprep.subr.mxu0 0.0
          %558 = vmatpush1.msra.mxu0 %v531
          %559 = vmatprep.subr.mxu0 0.0
          %560 = vmatpush1.msra.mxu0 %v532
          %561 = vmatprep.subr.mxu0 0.0
          %562 = vmatpush1.msra.mxu0 %v533
          %563 = vmatprep.subr.mxu0 0.0
          %564 = vmatpush1.msra.mxu0 %v534
          %565 = vmatprep.subr.mxu0 0.0
          %566 = vmatpush1.msra.mxu0 %v535
          %567 = vmatprep.subr.mxu0 0.0
          %568 = vmatpush1.msra.mxu0 %v536
          %569 = vmatprep.subr.mxu0 0.0
          %570 = vmatpush1.msra.mxu0 %v537
          %571 = vmatprep.subr.mxu0 0.0
          %572 = vmatpush1.msra.mxu0 %v538
          %573 = vmatprep.subr.mxu0 0.0
          %574 = vmatpush1.msra.mxu0 %v539
          %575 = vmatprep.subr.mxu0 0.0
          %576 = vmatpush1.msra.mxu0 %v540
          %577 = vmatprep.subr.mxu0 0.0
          %578 = vmatpush1.msra.mxu0 %v541
          %579 = vmatprep.subr.mxu0 0.0
          %580 = vmatpush1.msra.mxu0 %v542
          %581 = vmatprep.subr.mxu0 0.0
          %582 = vmatpush1.msra.mxu0 %v543
          %583 = vmatprep.subr.mxu0 0.0
          %584 = vmatpush1.msra.mxu0 0.0
          %585 = vmatprep.subr.mxu0 0.0
          %586 = vmatpush1.msra.mxu0 0.0
          %587 = vmatprep.subr.mxu0 0.0
          %588 = vmatpush1.msra.mxu0 0.0
          %589 = vmatprep.subr.mxu0 0.0
          %590 = vmatpush1.msra.mxu0 0.0
          %591 = vmatprep.subr.mxu0 0.0
          %592 = vmatpush1.msra.mxu0 0.0
          %593 = vmatprep.subr.mxu0 0.0
          %594 = vmatpush1.msra.mxu0 0.0
          %595 = vmatprep.subr.mxu0 0.0
          %596 = vmatpush1.msra.mxu0 0.0
          %597 = vmatprep.subr.mxu0 0.0
          %598 = vmatpush1.msra.mxu0 0.0
          %599 = vmatprep.subr.mxu0 0.0
          %600 = vmatpush1.msra.mxu0 0.0
          %601 = vmatprep.subr.mxu0 0.0
          %602 = vmatpush1.msra.mxu0 0.0
          %603 = vmatprep.subr.mxu0 0.0
          %604 = vmatpush1.msra.mxu0 0.0
          %605 = vmatprep.subr.mxu0 0.0
          %606 = vmatpush1.msra.mxu0 0.0
          %607 = vmatprep.subr.mxu0 0.0
          %608 = vmatpush1.msra.mxu0 0.0
          %609 = vmatprep.subr.mxu0 0.0
          %610 = vmatpush1.msra.mxu0 0.0
          %611 = vmatprep.subr.mxu0 0.0
          %612 = vmatpush1.msra.mxu0 0.0
          %613 = vmatprep.subr.mxu0 0.0
          %614 = vmatpush1.msra.mxu0 0.0
          %615 = vmatprep.mubr.f32.mxu0 0.0
          %616 = vmatmul.mubr.f32.gmra.mrb[0].mxu0 %v527
          %v617 = vpop.f32.mrb[0].mxu0
          %v618 = vadd.f32 %v549, %v617
          %v619 = vpop.f32.mrb[0].mxu0
          %620 = vdwg.mxu0
          %vm621 = vcmask 25600
          %622 = vst.msk [vmem:[#allocation6] sm:$0x3] %vm621, %v618
        $region68: #{mean_mil_forward.1} parent=55 // pred_fallthru
          _
        // Predicated region
        $region69: #{mean_mil_forward.1} parent=55 // pred_check
          %p623 = pneg %p250
        $region70: #{mean_mil_forward.1} parent=55 // pred_check_branch
          %625 = sbr.rel (%p623) target = $region72
        $region71: #{mean_mil_forward.1} parent=55 // pred_region
          %s627 = ssub.s32 32, 32
          %628 = vsyncadd [#allocation5], %s627
          %s629 = smul.addr %s28, 32
          %s630 = scalar_lea.hbm %s9, %s629
          %s632 = sshll.u32 [#allocation6], 4
          %s633 = int_to_ptr.vmem [resolvable:$true] %s632
          %635 = dma.vmem_to_hbm [thread:$0]  %s633, 32, %s630, [#allocation5]
        $region72: #{mean_mil_forward.1} parent=55 // pred_fallthru
          _
        // Predicated region
        $region73: #{mean_mil_forward.1} parent=55 // pred_check
          %p636 = pneg %p250
        $region74: #{mean_mil_forward.1} parent=55 // pred_check_branch
          %638 = sbr.rel (%p636) target = $region76
        $region75: #{mean_mil_forward.1} parent=55 // pred_region
          %639 = dma.done [#allocation5], 32
        $region76: #{mean_mil_forward.1} parent=55 // pred_fallthru
          _
      $region56: #{mean_mil_forward.1} parent=5 // pred_fallthru
        _
      %p640 = scmp.le.s32.totalorder 2, %s19
      // Predicated region
      $region77: #{mean_mil_forward.1} parent=5 // pred_check
        %p641 = pneg %p640
      $region78: #{mean_mil_forward.1} parent=5 // pred_check_branch
        %643 = sbr.rel (%p641) target = $region80
      $region79: #{mean_mil_forward.1} parent=5 // pred_region
        %s644 = ssub.s32 %s19, 2
      $region80: #{mean_mil_forward.1} parent=5 // pred_fallthru
        _
    $region6: #{mean_mil_forward.1} parent=1 // loop_footer
      %s23 = sadd.s32 1, %s19
    $region7: #{mean_mil_forward.1} parent=1 // loop_footer_branch
      %18 = sbr.rel target = $region3
    $region8: #{mean_mil_forward.1} parent=1 // loop_exit
      _
    %645 = vsyncpa [#allocation4], 1
    %s646 = scalar_lea.sflag [#allocation4], 1
    %647 = vsyncpa %s646, 1
    %648 = vsyncpa [#allocation5], 1
    %s649 = scalar_lea.sflag [#allocation5], 1
    %650 = vsyncpa %s649, 1

</llo_original>
